<compile_context>
chip_gen: v5e
topology: v5e:2x2
jax: 0.10.0
libtpu: 0.0.40
codegen_flags: <defaults>
</compile_context>

<pallas_src>
import math

import jax
import jax.numpy as jnp
from jax.experimental import pallas as pl
from jax.experimental.pallas import tpu as pltpu

_LANES = 128
_SMALL_BYTES = 64 * 1024  # below this, skip the kernel: squeeze is metadata-only


def _copy_kernel(x_ref, o_ref):
    # Pure ref copy: stays DMA/HBM-bound (matters most on v5e's single vst slot).
    o_ref[...] = x_ref[...]


def _sublane_min(itemsize):
    # f32 -> 8 sublanes, bf16/f16 -> 16, int8/fp8 -> 32.
    return {4: 8, 2: 16, 1: 32}.get(itemsize, 8)


def _pick_cols(padded_total, sub):
    """Largest lane-dense width dividing the (padded) element count while
    leaving enough rows for a >= 4-step grid."""
    for cand in (1024, 512, 256, 128):
        if padded_total % cand == 0 and padded_total // cand >= 4 * sub:
            return cand
    # Tiny arrays: a single lane-dense strip (padded_total is a multiple of 128).
    return _LANES


def _pick_row_tile(rows, cols, itemsize, sub):
    """Row tile targeting ~1 MiB blocks and a grid of >= 4 steps."""
    tile = max(sub, (1 << 20) // (cols * itemsize))   # ~1 MiB block byte target
    if rows >= 4 * sub:
        tile = min(tile, rows // 4)                   # keep >= 4 grid steps
    tile = max(sub, (tile // sub) * sub)              # multiple of sublane minimum
    if tile > rows:
        tile = rows                                   # block == full dim is legal
    return tile


def _pallas_copy(x, out_shape):
    """Lane-dense, pipelined identity copy of x reshaped to out_shape."""
    total = math.prod(out_shape) if out_shape else 1
    itemsize = jnp.dtype(x.dtype).itemsize
    sub = _sublane_min(itemsize)

    flat = jnp.reshape(x, (total,))
    padded_total = int(pl.cdiv(total, _LANES)) * _LANES
    if padded_total != total:
        # Non-128-divisible element count: pad -> kernel -> slice back.
        flat = jnp.pad(flat, (0, padded_total - total))

    cols = _pick_cols(padded_total, sub)
    rows = padded_total // cols
    x2d = jnp.reshape(flat, (rows, cols))

    tile = _pick_row_tile(rows, cols, itemsize, sub)
    grid = (pl.cdiv(rows, tile),)  # ragged last block handled by Pallas

    out2d = pl.pallas_call(
        _copy_kernel,
        out_shape=jax.ShapeDtypeStruct((rows, cols), x.dtype),
        grid=grid,
        in_specs=[pl.BlockSpec((tile, cols), lambda i: (i, 0))],
        out_specs=pl.BlockSpec((tile, cols), lambda i: (i, 0)),
        compiler_params=pltpu.CompilerParams(
            # Shards row blocks across both v7x TensorCores; harmless elsewhere.
            dimension_semantics=("parallel",),
            # No vmem_limit_bytes: <=1 MiB blocks (~4 MiB double-buffered) fit
            # every generation's default scoped VMEM with headroom.
        ),
        cost_estimate=pl.CostEstimate(
            flops=0,
            transcendentals=0,
            bytes_accessed=2 * rows * cols * itemsize,
        ),
    )(x2d)

    out_flat = jnp.reshape(out2d, (padded_total,))
    if padded_total != total:
        out_flat = out_flat[:total]
    return jnp.reshape(out_flat, out_shape)


def squeeze_dim(x, dim, *, force_kernel=False):
    """Pallas equivalent of torch.squeeze(x, dim=dim)."""
    ndim = x.ndim
    d = dim % ndim                      # torch accepts negative dims
    if x.shape[d] != 1:
        return x                        # torch semantics: non-unit dim -> no-op

    out_shape = x.shape[:d] + x.shape[d + 1:]
    total = math.prod(out_shape) if out_shape else 1

    # squeeze is metadata-only: skip the copy kernel for empty / tiny tensors
    # where launch + 2x HBM traffic dwarfs any benefit.
    if total == 0 or (not force_kernel
                      and total * jnp.dtype(x.dtype).itemsize < _SMALL_BYTES):
        return jnp.reshape(x, out_shape)

    return _pallas_copy(x, out_shape)


if __name__ == "__main__":
    key = jax.random.PRNGKey(0)

    # SqueezeDimModel(dim=1): (batch=2, 1, 16, 16) -> (2, 16, 16).
    # Small (2 KiB): metadata-only fast path (no kernel launch).
    x = jax.random.normal(key, (2, 1, 16, 16), dtype=jnp.float32)
    ref = jnp.squeeze(x, axis=1)
    out = jax.block_until_ready(squeeze_dim(x, 1))
    assert out.shape == ref.shape == (2, 16, 16), out.shape
    assert out.dtype == x.dtype
    assert bool(jnp.array_equal(out, ref))

    # Same small shape, but force the Pallas copy kernel to run once.
    out_k = jax.block_until_ready(squeeze_dim(x, 1, force_kernel=True))
    assert bool(jnp.array_equal(out_k, ref))

    # Negative dim (dim=-3 is the same singleton axis).
    out_neg = jax.block_until_ready(squeeze_dim(x, -3))
    assert bool(jnp.array_equal(out_neg, ref))

    # Squeeze of the last (lane) dim: wrapper reshape, kernel stays lane-dense.
    z = jax.random.normal(key, (2, 16, 16, 1), dtype=jnp.float32)
    out_last = jax.block_until_ready(squeeze_dim(z, -1, force_kernel=True))
    assert bool(jnp.array_equal(out_last, jnp.squeeze(z, axis=-1)))

    # No-op path (dim size != 1): must return x unchanged, no kernel launch.
    y = jax.random.normal(key, (2, 4, 16, 16), dtype=jnp.float32)
    out_noop = jax.block_until_ready(squeeze_dim(y, 1))
    assert out_noop.shape == y.shape
    assert bool(jnp.array_equal(out_noop, y))

    # Above-threshold input: (8, 1, 256, 256) f32 = 2 MiB -> kernel path,
    # (512, 1024) slab, 128-row tiles, 4-step "parallel" pipelined grid.
    w = jax.random.normal(key, (8, 1, 256, 256), dtype=jnp.float32)
    out_big = jax.block_until_ready(squeeze_dim(w, 1))
    assert bool(jnp.array_equal(out_big, jnp.squeeze(w, axis=1)))

    # Ragged grid: 60 rows, 8-row tiles, cdiv grid with a partial last block.
    r = jax.random.normal(key, (5, 1, 96, 128), dtype=jnp.float32)
    out_r = jax.block_until_ready(squeeze_dim(r, 1))
    assert bool(jnp.array_equal(out_r, jnp.squeeze(r, axis=1)))

    # Non-128-divisible element count: wrapper pads -> kernel -> slices back.
    p = jax.random.normal(key, (3, 1, 5, 7), dtype=jnp.float32)
    out_p = jax.block_until_ready(squeeze_dim(p, 1, force_kernel=True))
    assert bool(jnp.array_equal(out_p, jnp.squeeze(p, axis=1)))

    # bf16 exercises the 16-sublane minimum row tile.
    b = jax.random.normal(key, (4, 1, 64, 128), dtype=jnp.bfloat16)
    out_b = jax.block_until_ready(squeeze_dim(b, 1, force_kernel=True))
    assert bool(jnp.array_equal(out_b, jnp.squeeze(b, axis=1)))

    print("KERNEL_OK")
</pallas_src>

<mosaic_0001>
module attributes {stable_mosaic.version = 11 : i64} {
  func.func @_copy_kernel(%arg0: i32, %arg1: memref<4x128xf32, #tpu.memory_space<vmem>>, %arg2: memref<4x128xf32, #tpu.memory_space<vmem>>) attributes {dimension_semantics = [#tpu.dimension_semantics<parallel>], iteration_bounds = array<i64: 1>, scalar_prefetch = 0 : i64, scratch_operands = 0 : i64, tpu.core_type = #tpu.core_type<tc>, window_params = [{transform_indices = @transform_0, window_bounds = array<i64: 4, 128>}, {transform_indices = @transform_1, window_bounds = array<i64: 4, 128>}]} {
    %c0 = arith.constant 0 : index
    %c0_0 = arith.constant 0 : index
    %0 = vector.load %arg1[%c0, %c0_0] : memref<4x128xf32, #tpu.memory_space<vmem>>, vector<4x128xf32>
    %c0_1 = arith.constant 0 : index
    %c0_2 = arith.constant 0 : index
    %1 = vector.load %arg2[%c0_1, %c0_2] : memref<4x128xf32, #tpu.memory_space<vmem>>, vector<4x128xf32>
    tpu.vector_store %arg2[%c0_1, %c0_2], %0 {strides = array<i32>} : memref<4x128xf32, #tpu.memory_space<vmem>>, vector<4x128xf32>,
    return
  }
  func.func @transform_0(%arg0: i32) -> (i32, i32) {
    %c0_i32 = arith.constant 0 : i32
    %c0_i32_0 = arith.constant 0 : i32
    return %arg0, %c0_i32 : i32, i32
  }
  func.func @transform_1(%arg0: i32) -> (i32, i32) {
    %c0_i32 = arith.constant 0 : i32
    %c0_i32_0 = arith.constant 0 : i32
    return %arg0, %c0_i32 : i32, i32
  }
}

</mosaic_0001>

<llo_original>
// kernel: tpu_custom_call.1
$region0: #{tpu_custom_call.1}
  #allocation0 [shape = 'u32[]', space=smem, size = 0x4, offset = 0x4, fixed_abs, tag = 'smem constant byte address 0x4 - core index']
  #allocation1 [shape = 'u32[72,128]{1,0:T(1,128)}', space=vmem, size = 0x9000, scoped, tag = 'internal scratch']
  %s0 = inlined_call_operand.hbm [shape: f32[4,128], index: 0, kind: input, shape index: {}]
  %s1 = inlined_call_operand.hbm [shape: f32[4,128], index: 1, kind: output, shape index: {}]
  %s2 = sld [smem:[#allocation0]]
  $region18: #{tpu_custom_call.1} parent=0
    _
  %s4 = ssub.s32 1, %s2
  %s5 = scalar_select 0, %s4, %s2
  $region1: #{tpu_custom_call.1} parent=0
    #allocation2 [shape = 'u8[2048]{0}', space=vmem, size = 0x800, scoped, tag = 'input window, operand 0, single buffered']
    #allocation3 [shape = 's32[1]{0}', space=sflag, size = 0x4, scoped, tag = 'scoped memory for tpu_custom_call.1']
    #allocation4 [shape = 's32[1]{0}', space=sflag, size = 0x4, scoped, tag = 'scoped memory for tpu_custom_call.1']
    #allocation5 [shape = 'u8[2048]{0}', space=vmem, size = 0x800, scoped, tag = 'output window, operand 0, single buffered']
    %6 = vsyncpa [#allocation3], 0
    %7 = vsyncpa [#allocation4], 0
    // Predicated region
    $region2: #{tpu_custom_call.1} parent=1 // pred_check
      _
    $region3: #{tpu_custom_call.1} parent=1 // pred_check_branch
      %9 = sbr.rel (0) target = $region5
    $region4: #{tpu_custom_call.1} parent=1 // pred_region
      %11 = vsyncadd [#allocation3], 0
      %s13 = sshll.u32 %s0, 4
      %s14 = int_to_ptr.hbm [resolvable:$true] %s13
      %s15 = sshll.u32 [#allocation2], 4
      %s16 = int_to_ptr.vmem [resolvable:$true] %s15
      %18 = dma.hbm_to_vmem [thread:$0]  %s14, 64, %s16, [#allocation3]
    $region5: #{tpu_custom_call.1} parent=1 // pred_fallthru
      _
    // Predicated region
    $region6: #{tpu_custom_call.1} parent=1 // pred_check
      _
    $region7: #{tpu_custom_call.1} parent=1 // pred_check_branch
      %20 = sbr.rel (0) target = $region9
    $region8: #{tpu_custom_call.1} parent=1 // pred_region
      %22 = dma.done [#allocation3], 64
    $region9: #{tpu_custom_call.1} parent=1 // pred_fallthru
      _
    %v23 = vld [vmem:[#allocation2] sm:$0xf]
    %24 = vst [vmem:[#allocation5] sm:$0xf] %v23
    // Predicated region
    $region10: #{tpu_custom_call.1} parent=1 // pred_check
      _
    $region11: #{tpu_custom_call.1} parent=1 // pred_check_branch
      %26 = sbr.rel (0) target = $region13
    $region12: #{tpu_custom_call.1} parent=1 // pred_region
      %28 = vsyncadd [#allocation4], 0
      %s30 = sshll.u32 [#allocation5], 4
      %s31 = int_to_ptr.vmem [resolvable:$true] %s30
      %s32 = sshll.u32 %s1, 4
      %s33 = int_to_ptr.hbm [resolvable:$true] %s32
      %35 = dma.vmem_to_hbm [thread:$0]  %s31, 64, %s33, [#allocation4]
    $region13: #{tpu_custom_call.1} parent=1 // pred_fallthru
      _
    // Predicated region
    $region14: #{tpu_custom_call.1} parent=1 // pred_check
      _
    $region15: #{tpu_custom_call.1} parent=1 // pred_check_branch
      %37 = sbr.rel (0) target = $region17
    $region16: #{tpu_custom_call.1} parent=1 // pred_region
      %39 = dma.done [#allocation4], 64
    $region17: #{tpu_custom_call.1} parent=1 // pred_fallthru
      _
    %40 = vsyncpa [#allocation3], 1
    %41 = vsyncpa [#allocation4], 1

</llo_original>
